<compile_context>
chip_gen: v5e
topology: v5e:2x2
jax: 0.10.0
libtpu: 0.0.40
codegen_flags: <defaults>
</compile_context>

<pallas_src>
import jax
import jax.numpy as jnp
import numpy as np
from jax.experimental import pallas as pl
from jax.experimental.pallas import tpu as pltpu

EPS = 1e-5


def _make_basic_block_kernel(N, C, H, W):
    HW = H * W
    L = N * HW                              # all samples side by side on the lane axis
    inv_count = 1.0 / float(N * HW)

    def kernel(x_ref, w1_ref, g1_ref, b1_ref, w2_ref, g2_ref, b2_ref,
               out_ref, col_ref):
        # x_ref   : (N, C, H*W)   f32   activations, H*W on lanes (lane-dense)
        # w*_ref  : (C, 9*C)      bf16  conv weights, columns ordered (dy, dx, cin)
        # g*,b*   : (C, 1)        f32   BN affine
        # out_ref : (N, C, H*W)   f32
        # col_ref : (9*C, N*H*W)  f32   im2col scratch, rebuilt once per conv

        # Combined activation / residual: (C, N*HW).  HW is a multiple of 128, so this
        # lane concat is an aligned vreg copy (no relayout).
        x_cat = jnp.concatenate([x_ref[n] for n in range(N)], axis=-1)

        # Per-lane pixel coordinates within each sample, for the implicit-zero-pad
        # masks.  Float arithmetic avoids integer vector division; values are exact.
        gpix = jax.lax.broadcasted_iota(jnp.int32, (C, L), 1).astype(jnp.float32)
        pix = gpix - jnp.floor((gpix + 0.5) * (1.0 / HW)) * HW        # p mod HW
        py = jnp.floor((pix + 0.5) * (1.0 / W))                       # pixel row
        px = pix - py * W                                             # pixel column

        tap_masks = []
        for t in range(9):
            oy, ox = t // 3 - 1, t % 3 - 1
            conds = []
            if oy == -1:
                conds.append(py >= 0.5)                               # y >= 1
            elif oy == 1:
                conds.append(py <= H - 1.5)                           # y <= H-2
            if ox == -1:
                conds.append(px >= 0.5)                               # x >= 1
            elif ox == 1:
                conds.append(px <= W - 1.5)                           # x <= W-2
            m = None
            for c in conds:
                m = c if m is None else (m & c)
            tap_masks.append(m)                                       # None => interior

        def shift_flat(a, s):
            """out[:, p] = a[:, (p + s) % L].  Every wrapped lane (cross-row or
            cross-sample) is a masked border pixel, so wrap-around is harmless."""
            k = s % L
            if k == 0:
                return a
            doubled = jnp.concatenate([a, a], axis=-1)                # aligned lane concat
            return jax.lax.slice_in_dim(doubled, k, k + L, axis=-1)

        def conv_bn(act, w_ref, g_ref, b_ref):
            """act: (C, L) f32 -> conv3x3 (pad=1) + BatchNorm (batch stats), no ReLU."""
            # im2col, built once for the whole batch: 9 shifted+masked views stacked
            # on the channel axis (each store is a whole sublane-tile, C == 8).
            for t in range(9):
                oy, ox = t // 3 - 1, t % 3 - 1
                v = shift_flat(act, oy * W + ox)
                if tap_masks[t] is not None:
                    v = jnp.where(tap_masks[t], v, 0.0)
                col_ref[t * C:(t + 1) * C, :] = v
            # Single MXU matmul for the whole batch: (C, 9C) x (9C, L) -> (C, L),
            # bf16 inputs, f32 accumulation.
            acc = jnp.dot(w_ref[...], col_ref[...].astype(jnp.bfloat16),
                          preferred_element_type=jnp.float32)
            # One-pass batch statistics over all N*H*W pixels (f32).
            mean = jnp.sum(acc, axis=-1, keepdims=True) * inv_count          # (C, 1)
            msq = jnp.sum(acc * acc, axis=-1, keepdims=True) * inv_count     # (C, 1)
            var = msq - mean * mean
            scale = jax.lax.rsqrt(var + EPS) * g_ref[...]                    # (C, 1)
            offset = b_ref[...] - mean * scale                               # (C, 1)
            return acc * scale + offset

        h = jnp.maximum(conv_bn(x_cat, w1_ref, g1_ref, b1_ref), 0.0)   # conv1->bn1->relu
        y = conv_bn(h, w2_ref, g2_ref, b2_ref)                         # conv2->bn2
        z = jnp.maximum(y + x_cat, 0.0)                                # +residual -> relu
        for n in range(N):                                             # lane-aligned splits
            out_ref[n] = jax.lax.slice_in_dim(z, n * HW, (n + 1) * HW, axis=-1)

    return kernel


@jax.jit
def basic_block_forward(x_nchw, w1_oihw, gamma1, beta1, w2_oihw, gamma2, beta2):
    """BasicBlock forward (stride=1, downsample=None). x_nchw: (N,C,H,W) -> (N,C,H,W)."""
    N, C, H, W = x_nchw.shape
    P = w1_oihw.shape[0]
    assert P == C, "identity residual requires inplanes == planes"
    assert w1_oihw.shape == (P, C, 3, 3) and w2_oihw.shape == (P, P, 3, 3)

    # Free layout change: channels stay outer, H*W becomes the (lane-dense) minor dim.
    x_flat = x_nchw.astype(jnp.float32).reshape(N, C, H * W)

    # Weights: OIHW (PyTorch) -> (Cout, 9*Cin), columns ordered (dy, dx, cin); bf16 MXU.
    w1m = jnp.transpose(w1_oihw, (0, 2, 3, 1)).reshape(P, 9 * C).astype(jnp.bfloat16)
    w2m = jnp.transpose(w2_oihw, (0, 2, 3, 1)).reshape(P, 9 * P).astype(jnp.bfloat16)
    g1 = gamma1.astype(jnp.float32).reshape(P, 1)
    b1 = beta1.astype(jnp.float32).reshape(P, 1)
    g2 = gamma2.astype(jnp.float32).reshape(P, 1)
    b2 = beta2.astype(jnp.float32).reshape(P, 1)

    kernel = _make_basic_block_kernel(N, C, H, W)
    out_flat = pl.pallas_call(
        kernel,
        out_shape=jax.ShapeDtypeStruct((N, C, H * W), jnp.float32),
        in_specs=[pl.BlockSpec(memory_space=pltpu.MemorySpace.VMEM)] * 7,
        out_specs=pl.BlockSpec(memory_space=pltpu.MemorySpace.VMEM),
        scratch_shapes=[pltpu.VMEM((9 * C, N * H * W), jnp.float32)],
    )(x_flat, w1m, g1, b1, w2m, g2, b2)
    return out_flat.reshape(N, C, H, W)


def _reference(x, w1, g1, b1, w2, g2, b2):
    """Pure-JAX reference (lax conv, NCHW), mirroring the kernel's bf16 matmul inputs."""
    def conv(h, w):
        return jax.lax.conv_general_dilated(
            h.astype(jnp.bfloat16), w.astype(jnp.bfloat16), (1, 1), "SAME",
            dimension_numbers=("NCHW", "OIHW", "NCHW"),
            preferred_element_type=jnp.float32)

    def bn(h, g, b):
        m = h.mean(axis=(0, 2, 3), keepdims=True)
        v = ((h - m) ** 2).mean(axis=(0, 2, 3), keepdims=True)
        return ((h - m) * jax.lax.rsqrt(v + EPS) * g.reshape(1, -1, 1, 1)
                + b.reshape(1, -1, 1, 1))

    x = x.astype(jnp.float32)
    h = jax.nn.relu(bn(conv(x, w1), g1, b1))
    h = bn(conv(h, w2), g2, b2)
    return jax.nn.relu(h + x)


if __name__ == "__main__":
    # BasicBlock with inplanes == planes (downsample=None, stride=1).
    N, C, H, W = 2, 8, 16, 16
    key = jax.random.PRNGKey(0)
    kx, k1, k2, k3, k4 = jax.random.split(key, 5)

    x = jax.random.normal(kx, (N, C, H, W), jnp.float32)             # NCHW, like PyTorch
    w1 = jax.random.normal(k1, (C, C, 3, 3), jnp.float32) * 0.1      # OIHW, like nn.Conv2d
    w2 = jax.random.normal(k2, (C, C, 3, 3), jnp.float32) * 0.1
    g1 = 1.0 + 0.1 * jax.random.normal(k3, (C,), jnp.float32)        # BN affine params
    b1 = 0.1 * jax.random.normal(k4, (C,), jnp.float32)
    g2 = jnp.ones((C,), jnp.float32)                                 # PyTorch default init
    b2 = jnp.zeros((C,), jnp.float32)

    out = jax.block_until_ready(basic_block_forward(x, w1, g1, b1, w2, g2, b2))
    ref = jax.block_until_ready(jax.jit(_reference)(x, w1, g1, b1, w2, g2, b2))

    # Tolerance covers the bf16 rounding of conv inputs (both sides use bf16 x f32-acc).
    np.testing.assert_allclose(np.asarray(out), np.asarray(ref), atol=1e-2, rtol=1e-2)

    print("KERNEL_OK")
</pallas_src>

<mosaic_0001>
module attributes {stable_mosaic.version = 11 : i64} {
  func.func @kernel(%arg0: memref<2x8x256xf32, #tpu.memory_space<vmem>>, %arg1: memref<8x72xbf16, #tpu.memory_space<vmem>>, %arg2: memref<8x1xf32, #tpu.memory_space<vmem>>, %arg3: memref<8x1xf32, #tpu.memory_space<vmem>>, %arg4: memref<8x72xbf16, #tpu.memory_space<vmem>>, %arg5: memref<8x1xf32, #tpu.memory_space<vmem>>, %arg6: memref<8x1xf32, #tpu.memory_space<vmem>>, %arg7: memref<2x8x256xf32, #tpu.memory_space<vmem>>, %arg8: memref<72x512xf32, #tpu.memory_space<vmem>>) attributes {dimension_semantics = [], scalar_prefetch = 0 : i64, scratch_operands = 1 : i64, tpu.core_type = #tpu.core_type<tc>} {
    %c0 = arith.constant 0 : index
    %c0_0 = arith.constant 0 : index
    %c0_1 = arith.constant 0 : index
    %0 = vector.load %arg0[%c0, %c0_0, %c0_1] : memref<2x8x256xf32, #tpu.memory_space<vmem>>, vector<1x8x256xf32>
    %1 = vector.shape_cast %0 : vector<1x8x256xf32> to vector<8x256xf32>
    %c1 = arith.constant 1 : index
    %c0_2 = arith.constant 0 : index
    %c0_3 = arith.constant 0 : index
    %2 = vector.load %arg0[%c1, %c0_2, %c0_3] : memref<2x8x256xf32, #tpu.memory_space<vmem>>, vector<1x8x256xf32>
    %3 = vector.shape_cast %2 : vector<1x8x256xf32> to vector<8x256xf32>
    %4 = tpu.concatenate %1, %3 in 1 : vector<8x256xf32>, vector<8x256xf32> -> vector<8x512xf32>
    %5 = tpu.iota {dimensions = array<i32: 1>} : vector<8x512xi32>
    %6 = arith.sitofp %5 : vector<8x512xi32> to vector<8x512xf32>
    %cst = arith.constant 5.000000e-01 : f32
    %7 = vector.broadcast %cst : f32 to vector<8x512xf32>
    %8 = arith.addf %6, %7 : vector<8x512xf32>
    %cst_4 = arith.constant 3.906250e-03 : f32
    %9 = vector.broadcast %cst_4 : f32 to vector<8x512xf32>
    %10 = arith.mulf %8, %9 : vector<8x512xf32>
    %11 = math.floor %10 : vector<8x512xf32>
    %cst_5 = arith.constant 2.560000e+02 : f32
    %12 = vector.broadcast %cst_5 : f32 to vector<8x512xf32>
    %13 = arith.mulf %11, %12 : vector<8x512xf32>
    %14 = arith.subf %6, %13 : vector<8x512xf32>
    %cst_6 = arith.constant 5.000000e-01 : f32
    %15 = vector.broadcast %cst_6 : f32 to vector<8x512xf32>
    %16 = arith.addf %14, %15 : vector<8x512xf32>
    %cst_7 = arith.constant 6.250000e-02 : f32
    %17 = vector.broadcast %cst_7 : f32 to vector<8x512xf32>
    %18 = arith.mulf %16, %17 : vector<8x512xf32>
    %19 = math.floor %18 : vector<8x512xf32>
    %cst_8 = arith.constant 1.600000e+01 : f32
    %20 = vector.broadcast %cst_8 : f32 to vector<8x512xf32>
    %21 = arith.mulf %19, %20 : vector<8x512xf32>
    %22 = arith.subf %14, %21 : vector<8x512xf32>
    %cst_9 = arith.constant 5.000000e-01 : f32
    %23 = vector.broadcast %cst_9 : f32 to vector<8x512xf32>
    %24 = arith.cmpf oge, %19, %23 : vector<8x512xf32>
    %cst_10 = arith.constant 5.000000e-01 : f32
    %25 = vector.broadcast %cst_10 : f32 to vector<8x512xf32>
    %26 = arith.cmpf oge, %22, %25 : vector<8x512xf32>
    %27 = arith.andi %24, %26 : vector<8x512xi1>
    %cst_11 = arith.constant 5.000000e-01 : f32
    %28 = vector.broadcast %cst_11 : f32 to vector<8x512xf32>
    %29 = arith.cmpf oge, %19, %28 : vector<8x512xf32>
    %cst_12 = arith.constant 5.000000e-01 : f32
    %30 = vector.broadcast %cst_12 : f32 to vector<8x512xf32>
    %31 = arith.cmpf oge, %19, %30 : vector<8x512xf32>
    %cst_13 = arith.constant 1.450000e+01 : f32
    %32 = vector.broadcast %cst_13 : f32 to vector<8x512xf32>
    %33 = arith.cmpf ole, %22, %32 : vector<8x512xf32>
    %34 = arith.andi %31, %33 : vector<8x512xi1>
    %cst_14 = arith.constant 5.000000e-01 : f32
    %35 = vector.broadcast %cst_14 : f32 to vector<8x512xf32>
    %36 = arith.cmpf oge, %22, %35 : vector<8x512xf32>
    %cst_15 = arith.constant 1.450000e+01 : f32
    %37 = vector.broadcast %cst_15 : f32 to vector<8x512xf32>
    %38 = arith.cmpf ole, %22, %37 : vector<8x512xf32>
    %cst_16 = arith.constant 1.450000e+01 : f32
    %39 = vector.broadcast %cst_16 : f32 to vector<8x512xf32>
    %40 = arith.cmpf ole, %19, %39 : vector<8x512xf32>
    %cst_17 = arith.constant 5.000000e-01 : f32
    %41 = vector.broadcast %cst_17 : f32 to vector<8x512xf32>
    %42 = arith.cmpf oge, %22, %41 : vector<8x512xf32>
    %43 = arith.andi %40, %42 : vector<8x512xi1>
    %cst_18 = arith.constant 1.450000e+01 : f32
    %44 = vector.broadcast %cst_18 : f32 to vector<8x512xf32>
    %45 = arith.cmpf ole, %19, %44 : vector<8x512xf32>
    %cst_19 = arith.constant 1.450000e+01 : f32
    %46 = vector.broadcast %cst_19 : f32 to vector<8x512xf32>
    %47 = arith.cmpf ole, %19, %46 : vector<8x512xf32>
    %cst_20 = arith.constant 1.450000e+01 : f32
    %48 = vector.broadcast %cst_20 : f32 to vector<8x512xf32>
    %49 = arith.cmpf ole, %22, %48 : vector<8x512xf32>
    %50 = arith.andi %47, %49 : vector<8x512xi1>
    %51 = tpu.concatenate %4, %4 in 1 : vector<8x512xf32>, vector<8x512xf32> -> vector<8x1024xf32>
    %52 = vector.extract_strided_slice %51 {offsets = [0, 495], sizes = [8, 512], strides = [1, 1]} : vector<8x1024xf32> to vector<8x512xf32>
    %cst_21 = arith.constant 0.000000e+00 : f32
    %53 = vector.broadcast %cst_21 : f32 to vector<8x512xf32>
    %54 = arith.select %27, %52, %53 : vector<8x512xi1>, vector<8x512xf32>
    %c0_22 = arith.constant 0 : index
    %c0_23 = arith.constant 0 : index
    %55 = vector.load %arg8[%c0_22, %c0_23] : memref<72x512xf32, #tpu.memory_space<vmem>>, vector<8x512xf32>
    tpu.vector_store %arg8[%c0_22, %c0_23], %54 {strides = array<i32>} : memref<72x512xf32, #tpu.memory_space<vmem>>, vector<8x512xf32>,
    %56 = tpu.concatenate %4, %4 in 1 : vector<8x512xf32>, vector<8x512xf32> -> vector<8x1024xf32>
    %57 = vector.extract_strided_slice %56 {offsets = [0, 496], sizes = [8, 512], strides = [1, 1]} : vector<8x1024xf32> to vector<8x512xf32>
    %cst_24 = arith.constant 0.000000e+00 : f32
    %58 = vector.broadcast %cst_24 : f32 to vector<8x512xf32>
    %59 = arith.select %29, %57, %58 : vector<8x512xi1>, vector<8x512xf32>
    %c8 = arith.constant 8 : index
    %c0_25 = arith.constant 0 : index
    %60 = vector.load %arg8[%c8, %c0_25] : memref<72x512xf32, #tpu.memory_space<vmem>>, vector<8x512xf32>
    tpu.vector_store %arg8[%c8, %c0_25], %59 {strides = array<i32>} : memref<72x512xf32, #tpu.memory_space<vmem>>, vector<8x512xf32>,
    %61 = tpu.concatenate %4, %4 in 1 : vector<8x512xf32>, vector<8x512xf32> -> vector<8x1024xf32>
    %62 = vector.extract_strided_slice %61 {offsets = [0, 497], sizes = [8, 512], strides = [1, 1]} : vector<8x1024xf32> to vector<8x512xf32>
    %cst_26 = arith.constant 0.000000e+00 : f32
    %63 = vector.broadcast %cst_26 : f32 to vector<8x512xf32>
    %64 = arith.select %34, %62, %63 : vector<8x512xi1>, vector<8x512xf32>
    %c16 = arith.constant 16 : index
    %c0_27 = arith.constant 0 : index
    %65 = vector.load %arg8[%c16, %c0_27] : memref<72x512xf32, #tpu.memory_space<vmem>>, vector<8x512xf32>
    tpu.vector_store %arg8[%c16, %c0_27], %64 {strides = array<i32>} : memref<72x512xf32, #tpu.memory_space<vmem>>, vector<8x512xf32>,
    %66 = tpu.concatenate %4, %4 in 1 : vector<8x512xf32>, vector<8x512xf32> -> vector<8x1024xf32>
    %67 = vector.extract_strided_slice %66 {offsets = [0, 511], sizes = [8, 512], strides = [1, 1]} : vector<8x1024xf32> to vector<8x512xf32>
    %cst_28 = arith.constant 0.000000e+00 : f32
    %68 = vector.broadcast %cst_28 : f32 to vector<8x512xf32>
    %69 = arith.select %36, %67, %68 : vector<8x512xi1>, vector<8x512xf32>
    %c24 = arith.constant 24 : index
    %c0_29 = arith.constant 0 : index
    %70 = vector.load %arg8[%c24, %c0_29] : memref<72x512xf32, #tpu.memory_space<vmem>>, vector<8x512xf32>
    tpu.vector_store %arg8[%c24, %c0_29], %69 {strides = array<i32>} : memref<72x512xf32, #tpu.memory_space<vmem>>, vector<8x512xf32>,
    %c32 = arith.constant 32 : index
    %c0_30 = arith.constant 0 : index
    %71 = vector.load %arg8[%c32, %c0_30] : memref<72x512xf32, #tpu.memory_space<vmem>>, vector<8x512xf32>
    tpu.vector_store %arg8[%c32, %c0_30], %4 {strides = array<i32>} : memref<72x512xf32, #tpu.memory_space<vmem>>, vector<8x512xf32>,
    %72 = tpu.concatenate %4, %4 in 1 : vector<8x512xf32>, vector<8x512xf32> -> vector<8x1024xf32>
    %73 = vector.extract_strided_slice %72 {offsets = [0, 1], sizes = [8, 512], strides = [1, 1]} : vector<8x1024xf32> to vector<8x512xf32>
    %cst_31 = arith.constant 0.000000e+00 : f32
    %74 = vector.broadcast %cst_31 : f32 to vector<8x512xf32>
    %75 = arith.select %38, %73, %74 : vector<8x512xi1>, vector<8x512xf32>
    %c40 = arith.constant 40 : index
    %c0_32 = arith.constant 0 : index
    %76 = vector.load %arg8[%c40, %c0_32] : memref<72x512xf32, #tpu.memory_space<vmem>>, vector<8x512xf32>
    tpu.vector_store %arg8[%c40, %c0_32], %75 {strides = array<i32>} : memref<72x512xf32, #tpu.memory_space<vmem>>, vector<8x512xf32>,
    %77 = tpu.concatenate %4, %4 in 1 : vector<8x512xf32>, vector<8x512xf32> -> vector<8x1024xf32>
    %78 = vector.extract_strided_slice %77 {offsets = [0, 15], sizes = [8, 512], strides = [1, 1]} : vector<8x1024xf32> to vector<8x512xf32>
    %cst_33 = arith.constant 0.000000e+00 : f32
    %79 = vector.broadcast %cst_33 : f32 to vector<8x512xf32>
    %80 = arith.select %43, %78, %79 : vector<8x512xi1>, vector<8x512xf32>
    %c48 = arith.constant 48 : index
    %c0_34 = arith.constant 0 : index
    %81 = vector.load %arg8[%c48, %c0_34] : memref<72x512xf32, #tpu.memory_space<vmem>>, vector<8x512xf32>
    tpu.vector_store %arg8[%c48, %c0_34], %80 {strides = array<i32>} : memref<72x512xf32, #tpu.memory_space<vmem>>, vector<8x512xf32>,
    %82 = tpu.concatenate %4, %4 in 1 : vector<8x512xf32>, vector<8x512xf32> -> vector<8x1024xf32>
    %83 = vector.extract_strided_slice %82 {offsets = [0, 16], sizes = [8, 512], strides = [1, 1]} : vector<8x1024xf32> to vector<8x512xf32>
    %cst_35 = arith.constant 0.000000e+00 : f32
    %84 = vector.broadcast %cst_35 : f32 to vector<8x512xf32>
    %85 = arith.select %45, %83, %84 : vector<8x512xi1>, vector<8x512xf32>
    %c56 = arith.constant 56 : index
    %c0_36 = arith.constant 0 : index
    %86 = vector.load %arg8[%c56, %c0_36] : memref<72x512xf32, #tpu.memory_space<vmem>>, vector<8x512xf32>
    tpu.vector_store %arg8[%c56, %c0_36], %85 {strides = array<i32>} : memref<72x512xf32, #tpu.memory_space<vmem>>, vector<8x512xf32>,
    %87 = tpu.concatenate %4, %4 in 1 : vector<8x512xf32>, vector<8x512xf32> -> vector<8x1024xf32>
    %88 = vector.extract_strided_slice %87 {offsets = [0, 17], sizes = [8, 512], strides = [1, 1]} : vector<8x1024xf32> to vector<8x512xf32>
    %cst_37 = arith.constant 0.000000e+00 : f32
    %89 = vector.broadcast %cst_37 : f32 to vector<8x512xf32>
    %90 = arith.select %50, %88, %89 : vector<8x512xi1>, vector<8x512xf32>
    %c64 = arith.constant 64 : index
    %c0_38 = arith.constant 0 : index
    %91 = vector.load %arg8[%c64, %c0_38] : memref<72x512xf32, #tpu.memory_space<vmem>>, vector<8x512xf32>
    tpu.vector_store %arg8[%c64, %c0_38], %90 {strides = array<i32>} : memref<72x512xf32, #tpu.memory_space<vmem>>, vector<8x512xf32>,
    %c0_39 = arith.constant 0 : index
    %c0_40 = arith.constant 0 : index
    %92 = vector.load %arg1[%c0_39, %c0_40] : memref<8x72xbf16, #tpu.memory_space<vmem>>, vector<8x72xbf16>
    %c0_41 = arith.constant 0 : index
    %c0_42 = arith.constant 0 : index
    %93 = vector.load %arg8[%c0_41, %c0_42] : memref<72x512xf32, #tpu.memory_space<vmem>>, vector<72x512xf32>
    %94 = arith.truncf %93 : vector<72x512xf32> to vector<72x512xbf16>
    %cst_43 = arith.constant dense<0.000000e+00> : vector<8x512xf32>
    %95 = tpu.matmul %92, %94, %cst_43 {dimension_numbers = #tpu.dot_dimension_numbers<[1], [0], [0], [1], [0, 0, 1, 1], [], []>} : vector<8x72xbf16>, vector<72x512xbf16>, vector<8x512xf32> -> vector<8x512xf32>
    %cst_44 = arith.constant dense<0.000000e+00> : vector<8xf32>
    %96 = vector.multi_reduction <add>, %95, %cst_44 [1] : vector<8x512xf32> to vector<8xf32>
    %97 = vector.shape_cast %96 : vector<8xf32> to vector<8x1xf32>
    %cst_45 = arith.constant 0.001953125 : f32
    %98 = vector.broadcast %cst_45 : f32 to vector<8x1xf32>
    %99 = arith.mulf %97, %98 : vector<8x1xf32>
    %100 = arith.mulf %95, %95 : vector<8x512xf32>
    %cst_46 = arith.constant dense<0.000000e+00> : vector<8xf32>
    %101 = vector.multi_reduction <add>, %100, %cst_46 [1] : vector<8x512xf32> to vector<8xf32>
    %102 = vector.shape_cast %101 : vector<8xf32> to vector<8x1xf32>
    %cst_47 = arith.constant 0.001953125 : f32
    %103 = vector.broadcast %cst_47 : f32 to vector<8x1xf32>
    %104 = arith.mulf %102, %103 : vector<8x1xf32>
    %105 = arith.mulf %99, %99 : vector<8x1xf32>
    %106 = arith.subf %104, %105 : vector<8x1xf32>
    %cst_48 = arith.constant 9.99999974E-6 : f32
    %107 = vector.broadcast %cst_48 : f32 to vector<8x1xf32>
    %108 = arith.addf %106, %107 : vector<8x1xf32>
    %109 = math.rsqrt %108 : vector<8x1xf32>
    %c0_49 = arith.constant 0 : index
    %c0_50 = arith.constant 0 : index
    %110 = vector.load %arg2[%c0_49, %c0_50] : memref<8x1xf32, #tpu.memory_space<vmem>>, vector<8x1xf32>
    %111 = arith.mulf %109, %110 : vector<8x1xf32>
    %c0_51 = arith.constant 0 : index
    %c0_52 = arith.constant 0 : index
    %112 = vector.load %arg3[%c0_51, %c0_52] : memref<8x1xf32, #tpu.memory_space<vmem>>, vector<8x1xf32>
    %113 = arith.mulf %99, %111 : vector<8x1xf32>
    %114 = arith.subf %112, %113 : vector<8x1xf32>
    %115 = vector.broadcast %111 : vector<8x1xf32> to vector<8x512xf32>
    %116 = arith.mulf %95, %115 : vector<8x512xf32>
    %117 = vector.broadcast %114 : vector<8x1xf32> to vector<8x512xf32>
    %118 = arith.addf %116, %117 : vector<8x512xf32>
    %cst_53 = arith.constant 0.000000e+00 : f32
    %119 = vector.broadcast %cst_53 : f32 to vector<8x512xf32>
    %120 = arith.maximumf %118, %119 : vector<8x512xf32>
    %121 = tpu.concatenate %120, %120 in 1 : vector<8x512xf32>, vector<8x512xf32> -> vector<8x1024xf32>
    %122 = vector.extract_strided_slice %121 {offsets = [0, 495], sizes = [8, 512], strides = [1, 1]} : vector<8x1024xf32> to vector<8x512xf32>
    %cst_54 = arith.constant 0.000000e+00 : f32
    %123 = vector.broadcast %cst_54 : f32 to vector<8x512xf32>
    %124 = arith.select %27, %122, %123 : vector<8x512xi1>, vector<8x512xf32>
    %c0_55 = arith.constant 0 : index
    %c0_56 = arith.constant 0 : index
    %125 = vector.load %arg8[%c0_55, %c0_56] : memref<72x512xf32, #tpu.memory_space<vmem>>, vector<8x512xf32>
    tpu.vector_store %arg8[%c0_55, %c0_56], %124 {strides = array<i32>} : memref<72x512xf32, #tpu.memory_space<vmem>>, vector<8x512xf32>,
    %126 = tpu.concatenate %120, %120 in 1 : vector<8x512xf32>, vector<8x512xf32> -> vector<8x1024xf32>
    %127 = vector.extract_strided_slice %126 {offsets = [0, 496], sizes = [8, 512], strides = [1, 1]} : vector<8x1024xf32> to vector<8x512xf32>
    %cst_57 = arith.constant 0.000000e+00 : f32
    %128 = vector.broadcast %cst_57 : f32 to vector<8x512xf32>
    %129 = arith.select %29, %127, %128 : vector<8x512xi1>, vector<8x512xf32>
    %c8_58 = arith.constant 8 : index
    %c0_59 = arith.constant 0 : index
    %130 = vector.load %arg8[%c8_58, %c0_59] : memref<72x512xf32, #tpu.memory_space<vmem>>, vector<8x512xf32>
    tpu.vector_store %arg8[%c8_58, %c0_59], %129 {strides = array<i32>} : memref<72x512xf32, #tpu.memory_space<vmem>>, vector<8x512xf32>,
    %131 = tpu.concatenate %120, %120 in 1 : vector<8x512xf32>, vector<8x512xf32> -> vector<8x1024xf32>
    %132 = vector.extract_strided_slice %131 {offsets = [0, 497], sizes = [8, 512], strides = [1, 1]} : vector<8x1024xf32> to vector<8x512xf32>
    %cst_60 = arith.constant 0.000000e+00 : f32
    %133 = vector.broadcast %cst_60 : f32 to vector<8x512xf32>
    %134 = arith.select %34, %132, %133 : vector<8x512xi1>, vector<8x512xf32>
    %c16_61 = arith.constant 16 : index
    %c0_62 = arith.constant 0 : index
    %135 = vector.load %arg8[%c16_61, %c0_62] : memref<72x512xf32, #tpu.memory_space<vmem>>, vector<8x512xf32>
    tpu.vector_store %arg8[%c16_61, %c0_62], %134 {strides = array<i32>} : memref<72x512xf32, #tpu.memory_space<vmem>>, vector<8x512xf32>,
    %136 = tpu.concatenate %120, %120 in 1 : vector<8x512xf32>, vector<8x512xf32> -> vector<8x1024xf32>
    %137 = vector.extract_strided_slice %136 {offsets = [0, 511], sizes = [8, 512], strides = [1, 1]} : vector<8x1024xf32> to vector<8x512xf32>
    %cst_63 = arith.constant 0.000000e+00 : f32
    %138 = vector.broadcast %cst_63 : f32 to vector<8x512xf32>
    %139 = arith.select %36, %137, %138 : vector<8x512xi1>, vector<8x512xf32>
    %c24_64 = arith.constant 24 : index
    %c0_65 = arith.constant 0 : index
    %140 = vector.load %arg8[%c24_64, %c0_65] : memref<72x512xf32, #tpu.memory_space<vmem>>, vector<8x512xf32>
    tpu.vector_store %arg8[%c24_64, %c0_65], %139 {strides = array<i32>} : memref<72x512xf32, #tpu.memory_space<vmem>>, vector<8x512xf32>,
    %c32_66 = arith.constant 32 : index
    %c0_67 = arith.constant 0 : index
    %141 = vector.load %arg8[%c32_66, %c0_67] : memref<72x512xf32, #tpu.memory_space<vmem>>, vector<8x512xf32>
    tpu.vector_store %arg8[%c32_66, %c0_67], %120 {strides = array<i32>} : memref<72x512xf32, #tpu.memory_space<vmem>>, vector<8x512xf32>,
    %142 = tpu.concatenate %120, %120 in 1 : vector<8x512xf32>, vector<8x512xf32> -> vector<8x1024xf32>
    %143 = vector.extract_strided_slice %142 {offsets = [0, 1], sizes = [8, 512], strides = [1, 1]} : vector<8x1024xf32> to vector<8x512xf32>
    %cst_68 = arith.constant 0.000000e+00 : f32
    %144 = vector.broadcast %cst_68 : f32 to vector<8x512xf32>
    %145 = arith.select %38, %143, %144 : vector<8x512xi1>, vector<8x512xf32>
    %c40_69 = arith.constant 40 : index
    %c0_70 = arith.constant 0 : index
    %146 = vector.load %arg8[%c40_69, %c0_70] : memref<72x512xf32, #tpu.memory_space<vmem>>, vector<8x512xf32>
    tpu.vector_store %arg8[%c40_69, %c0_70], %145 {strides = array<i32>} : memref<72x512xf32, #tpu.memory_space<vmem>>, vector<8x512xf32>,
    %147 = tpu.concatenate %120, %120 in 1 : vector<8x512xf32>, vector<8x512xf32> -> vector<8x1024xf32>
    %148 = vector.extract_strided_slice %147 {offsets = [0, 15], sizes = [8, 512], strides = [1, 1]} : vector<8x1024xf32> to vector<8x512xf32>
    %cst_71 = arith.constant 0.000000e+00 : f32
    %149 = vector.broadcast %cst_71 : f32 to vector<8x512xf32>
    %150 = arith.select %43, %148, %149 : vector<8x512xi1>, vector<8x512xf32>
    %c48_72 = arith.constant 48 : index
    %c0_73 = arith.constant 0 : index
    %151 = vector.load %arg8[%c48_72, %c0_73] : memref<72x512xf32, #tpu.memory_space<vmem>>, vector<8x512xf32>
    tpu.vector_store %arg8[%c48_72, %c0_73], %150 {strides = array<i32>} : memref<72x512xf32, #tpu.memory_space<vmem>>, vector<8x512xf32>,
    %152 = tpu.concatenate %120, %120 in 1 : vector<8x512xf32>, vector<8x512xf32> -> vector<8x1024xf32>
    %153 = vector.extract_strided_slice %152 {offsets = [0, 16], sizes = [8, 512], strides = [1, 1]} : vector<8x1024xf32> to vector<8x512xf32>
    %cst_74 = arith.constant 0.000000e+00 : f32
    %154 = vector.broadcast %cst_74 : f32 to vector<8x512xf32>
    %155 = arith.select %45, %153, %154 : vector<8x512xi1>, vector<8x512xf32>
    %c56_75 = arith.constant 56 : index
    %c0_76 = arith.constant 0 : index
    %156 = vector.load %arg8[%c56_75, %c0_76] : memref<72x512xf32, #tpu.memory_space<vmem>>, vector<8x512xf32>
    tpu.vector_store %arg8[%c56_75, %c0_76], %155 {strides = array<i32>} : memref<72x512xf32, #tpu.memory_space<vmem>>, vector<8x512xf32>,
    %157 = tpu.concatenate %120, %120 in 1 : vector<8x512xf32>, vector<8x512xf32> -> vector<8x1024xf32>
    %158 = vector.extract_strided_slice %157 {offsets = [0, 17], sizes = [8, 512], strides = [1, 1]} : vector<8x1024xf32> to vector<8x512xf32>
    %cst_77 = arith.constant 0.000000e+00 : f32
    %159 = vector.broadcast %cst_77 : f32 to vector<8x512xf32>
    %160 = arith.select %50, %158, %159 : vector<8x512xi1>, vector<8x512xf32>
    %c64_78 = arith.constant 64 : index
    %c0_79 = arith.constant 0 : index
    %161 = vector.load %arg8[%c64_78, %c0_79] : memref<72x512xf32, #tpu.memory_space<vmem>>, vector<8x512xf32>
    tpu.vector_store %arg8[%c64_78, %c0_79], %160 {strides = array<i32>} : memref<72x512xf32, #tpu.memory_space<vmem>>, vector<8x512xf32>,
    %c0_80 = arith.constant 0 : index
    %c0_81 = arith.constant 0 : index
    %162 = vector.load %arg4[%c0_80, %c0_81] : memref<8x72xbf16, #tpu.memory_space<vmem>>, vector<8x72xbf16>
    %c0_82 = arith.constant 0 : index
    %c0_83 = arith.constant 0 : index
    %163 = vector.load %arg8[%c0_82, %c0_83] : memref<72x512xf32, #tpu.memory_space<vmem>>, vector<72x512xf32>
    %164 = arith.truncf %163 : vector<72x512xf32> to vector<72x512xbf16>
    %cst_84 = arith.constant dense<0.000000e+00> : vector<8x512xf32>
    %165 = tpu.matmul %162, %164, %cst_84 {dimension_numbers = #tpu.dot_dimension_numbers<[1], [0], [0], [1], [0, 0, 1, 1], [], []>} : vector<8x72xbf16>, vector<72x512xbf16>, vector<8x512xf32> -> vector<8x512xf32>
    %cst_85 = arith.constant dense<0.000000e+00> : vector<8xf32>
    %166 = vector.multi_reduction <add>, %165, %cst_85 [1] : vector<8x512xf32> to vector<8xf32>
    %167 = vector.shape_cast %166 : vector<8xf32> to vector<8x1xf32>
    %cst_86 = arith.constant 0.001953125 : f32
    %168 = vector.broadcast %cst_86 : f32 to vector<8x1xf32>
    %169 = arith.mulf %167, %168 : vector<8x1xf32>
    %170 = arith.mulf %165, %165 : vector<8x512xf32>
    %cst_87 = arith.constant dense<0.000000e+00> : vector<8xf32>
    %171 = vector.multi_reduction <add>, %170, %cst_87 [1] : vector<8x512xf32> to vector<8xf32>
    %172 = vector.shape_cast %171 : vector<8xf32> to vector<8x1xf32>
    %cst_88 = arith.constant 0.001953125 : f32
    %173 = vector.broadcast %cst_88 : f32 to vector<8x1xf32>
    %174 = arith.mulf %172, %173 : vector<8x1xf32>
    %175 = arith.mulf %169, %169 : vector<8x1xf32>
    %176 = arith.subf %174, %175 : vector<8x1xf32>
    %cst_89 = arith.constant 9.99999974E-6 : f32
    %177 = vector.broadcast %cst_89 : f32 to vector<8x1xf32>
    %178 = arith.addf %176, %177 : vector<8x1xf32>
    %179 = math.rsqrt %178 : vector<8x1xf32>
    %c0_90 = arith.constant 0 : index
    %c0_91 = arith.constant 0 : index
    %180 = vector.load %arg5[%c0_90, %c0_91] : memref<8x1xf32, #tpu.memory_space<vmem>>, vector<8x1xf32>
    %181 = arith.mulf %179, %180 : vector<8x1xf32>
    %c0_92 = arith.constant 0 : index
    %c0_93 = arith.constant 0 : index
    %182 = vector.load %arg6[%c0_92, %c0_93] : memref<8x1xf32, #tpu.memory_space<vmem>>, vector<8x1xf32>
    %183 = arith.mulf %169, %181 : vector<8x1xf32>
    %184 = arith.subf %182, %183 : vector<8x1xf32>
    %185 = vector.broadcast %181 : vector<8x1xf32> to vector<8x512xf32>
    %186 = arith.mulf %165, %185 : vector<8x512xf32>
    %187 = vector.broadcast %184 : vector<8x1xf32> to vector<8x512xf32>
    %188 = arith.addf %186, %187 : vector<8x512xf32>
    %189 = arith.addf %188, %4 : vector<8x512xf32>
    %cst_94 = arith.constant 0.000000e+00 : f32
    %190 = vector.broadcast %cst_94 : f32 to vector<8x512xf32>
    %191 = arith.maximumf %189, %190 : vector<8x512xf32>
    %192 = vector.extract_strided_slice %191 {offsets = [0, 0], sizes = [8, 256], strides = [1, 1]} : vector<8x512xf32> to vector<8x256xf32>
    %c0_95 = arith.constant 0 : index
    %c0_96 = arith.constant 0 : index
    %c0_97 = arith.constant 0 : index
    %193 = vector.load %arg7[%c0_95, %c0_96, %c0_97] : memref<2x8x256xf32, #tpu.memory_space<vmem>>, vector<1x8x256xf32>
    %194 = vector.shape_cast %193 : vector<1x8x256xf32> to vector<8x256xf32>
    %195 = vector.shape_cast %192 : vector<8x256xf32> to vector<1x8x256xf32>
    tpu.vector_store %arg7[%c0_95, %c0_96, %c0_97], %195 {strides = array<i32>} : memref<2x8x256xf32, #tpu.memory_space<vmem>>, vector<1x8x256xf32>,
    %196 = vector.extract_strided_slice %191 {offsets = [0, 256], sizes = [8, 256], strides = [1, 1]} : vector<8x512xf32> to vector<8x256xf32>
    %c1_98 = arith.constant 1 : index
    %c0_99 = arith.constant 0 : index
    %c0_100 = arith.constant 0 : index
    %197 = vector.load %arg7[%c1_98, %c0_99, %c0_100] : memref<2x8x256xf32, #tpu.memory_space<vmem>>, vector<1x8x256xf32>
    %198 = vector.shape_cast %197 : vector<1x8x256xf32> to vector<8x256xf32>
    %199 = vector.shape_cast %196 : vector<8x256xf32> to vector<1x8x256xf32>
    tpu.vector_store %arg7[%c1_98, %c0_99, %c0_100], %199 {strides = array<i32>} : memref<2x8x256xf32, #tpu.memory_space<vmem>>, vector<1x8x256xf32>,
    return
  }
}

</mosaic_0001>

<llo_original>
// kernel: basic_block_forward.1
$region0: #{basic_block_forward.1}
  #allocation0 [shape = 'u32[]', space=smem, size = 0x4, offset = 0x4, fixed_abs, tag = 'smem constant byte address 0x4 - core index']
  #allocation1 [shape = 'u32[72,128]{1,0:T(1,128)}', space=vmem, size = 0x9000, scoped, tag = 'internal scratch']
  #allocation2 [shape = 'f32[72,512]{1,0:T(8,128)}', space=vmem, size = 0x24000, scoped, tag = 'scratch operand']
  %s0 = inlined_call_operand.vmem [shape: f32[2,8,256], index: 0, kind: input, shape index: {}]
  %s1 = inlined_call_operand.vmem [shape: bf16[8,72], index: 1, kind: input, shape index: {}]
  %s2 = inlined_call_operand.vmem [shape: f32[8,1], index: 2, kind: input, shape index: {}]
  %s3 = inlined_call_operand.vmem [shape: f32[8,1], index: 3, kind: input, shape index: {}]
  %s4 = inlined_call_operand.vmem [shape: bf16[8,72], index: 4, kind: input, shape index: {}]
  %s5 = inlined_call_operand.vmem [shape: f32[8,1], index: 5, kind: input, shape index: {}]
  %s6 = inlined_call_operand.vmem [shape: f32[8,1], index: 6, kind: input, shape index: {}]
  %s7 = inlined_call_operand.vmem [shape: f32[2,8,256], index: 7, kind: output, shape index: {}]
  %s8 = sld [smem:[#allocation0]]
  $region38: #{basic_block_forward.1} parent=0
    _
  %s10 = ssub.s32 1, %s8
  %s11 = scalar_select 0, %s10, %s8
  // Predicated region
  $region2: #{basic_block_forward.1} parent=0 // pred_check
    _
  $region3: #{basic_block_forward.1} parent=0 // pred_check_branch
    %13 = sbr.rel (0) target = $region5
  $region4: #{basic_block_forward.1} parent=0 // pred_region
    _
  $region5: #{basic_block_forward.1} parent=0 // pred_fallthru
    _
  // Predicated region
  $region6: #{basic_block_forward.1} parent=0 // pred_check
    _
  $region7: #{basic_block_forward.1} parent=0 // pred_check_branch
    %15 = sbr.rel (0) target = $region9
  $region8: #{basic_block_forward.1} parent=0 // pred_region
    _
  $region9: #{basic_block_forward.1} parent=0 // pred_fallthru
    _
  // Predicated region
  $region10: #{basic_block_forward.1} parent=0 // pred_check
    _
  $region11: #{basic_block_forward.1} parent=0 // pred_check_branch
    %17 = sbr.rel (0) target = $region13
  $region12: #{basic_block_forward.1} parent=0 // pred_region
    _
  $region13: #{basic_block_forward.1} parent=0 // pred_fallthru
    _
  // Predicated region
  $region14: #{basic_block_forward.1} parent=0 // pred_check
    _
  $region15: #{basic_block_forward.1} parent=0 // pred_check_branch
    %19 = sbr.rel (0) target = $region17
  $region16: #{basic_block_forward.1} parent=0 // pred_region
    _
  $region17: #{basic_block_forward.1} parent=0 // pred_fallthru
    _
  // Predicated region
  $region18: #{basic_block_forward.1} parent=0 // pred_check
    _
  $region19: #{basic_block_forward.1} parent=0 // pred_check_branch
    %21 = sbr.rel (0) target = $region21
  $region20: #{basic_block_forward.1} parent=0 // pred_region
    _
  $region21: #{basic_block_forward.1} parent=0 // pred_fallthru
    _
  // Predicated region
  $region22: #{basic_block_forward.1} parent=0 // pred_check
    _
  $region23: #{basic_block_forward.1} parent=0 // pred_check_branch
    %23 = sbr.rel (0) target = $region25
  $region24: #{basic_block_forward.1} parent=0 // pred_region
    _
  $region25: #{basic_block_forward.1} parent=0 // pred_fallthru
    _
  // Predicated region
  $region26: #{basic_block_forward.1} parent=0 // pred_check
    _
  $region27: #{basic_block_forward.1} parent=0 // pred_check_branch
    %25 = sbr.rel (0) target = $region29
  $region28: #{basic_block_forward.1} parent=0 // pred_region
    _
  $region29: #{basic_block_forward.1} parent=0 // pred_fallthru
    _
  %v27 = vld [vmem:[%s0] sm:$0xff]
  %v28 = vld [vmem:[%s0 + $0x8] sm:$0xff]
  %s29 = scalar_lea.vmem %s0, 16
  %v30 = vld [vmem:[%s29] sm:$0xff]
  %v31 = vld [vmem:[%s29 + $0x8] sm:$0xff]
  %v32 = vlaneseq
  %v33 = vand.u32 %v32, 127
  %v34 = vadd.s32 %v33, 128
  %v35 = vadd.s32 %v33, 256
  %v36 = vadd.s32 %v33, 384
  %v37 = vcvt.s32.f32 %v33
  %v38 = vcvt.s32.f32 %v34
  %v39 = vcvt.s32.f32 %v35
  %v40 = vcvt.s32.f32 %v36
  %v41 = vadd.f32 %v37, 0.5
  %v42 = vadd.f32 %v38, 0.5
  %v43 = vadd.f32 %v39, 0.5
  %v44 = vadd.f32 %v40, 0.5
  %v45 = vmul.f32 %v41, 0.00390625
  %v46 = vmul.f32 %v42, 0.00390625
  %v47 = vmul.f32 %v43, 0.00390625
  %v48 = vmul.f32 %v44, 0.00390625
  %v49 = vfloor.f32 %v45
  %v50 = vfloor.f32 %v46
  %v51 = vfloor.f32 %v47
  %v52 = vfloor.f32 %v48
  %v53 = vmul.f32 %v49, 256.0
  %v54 = vmul.f32 %v50, 256.0
  %v55 = vmul.f32 %v51, 256.0
  %v56 = vmul.f32 %v52, 256.0
  %v57 = vsub.f32 %v37, %v53
  %v58 = vsub.f32 %v38, %v54
  %v59 = vsub.f32 %v39, %v55
  %v60 = vsub.f32 %v40, %v56
  %v61 = vadd.f32 %v57, 0.5
  %v62 = vadd.f32 %v58, 0.5
  %v63 = vadd.f32 %v59, 0.5
  %v64 = vadd.f32 %v60, 0.5
  %v65 = vmul.f32 %v61, 0.0625
  %v66 = vmul.f32 %v62, 0.0625
  %v67 = vmul.f32 %v63, 0.0625
  %v68 = vmul.f32 %v64, 0.0625
  %v69 = vfloor.f32 %v65
  %v70 = vfloor.f32 %v66
  %v71 = vfloor.f32 %v67
  %v72 = vfloor.f32 %v68
  %v73 = vmul.f32 %v69, 16.0
  %v74 = vmul.f32 %v70, 16.0
  %v75 = vmul.f32 %v71, 16.0
  %v76 = vmul.f32 %v72, 16.0
  %v77 = vsub.f32 %v57, %v73
  %v78 = vsub.f32 %v58, %v74
  %v79 = vsub.f32 %v59, %v75
  %v80 = vsub.f32 %v60, %v76
  %vm81 = vcmp.ge.f32.partialorder %v69, 0.5
  %vm82 = vcmp.ge.f32.partialorder %v70, 0.5
  %vm83 = vcmp.ge.f32.partialorder %v71, 0.5
  %vm84 = vcmp.ge.f32.partialorder %v72, 0.5
  %vm85 = vcmp.ge.f32.partialorder %v77, 0.5
  %vm86 = vcmp.ge.f32.partialorder %v78, 0.5
  %vm87 = vcmp.ge.f32.partialorder %v79, 0.5
  %vm88 = vcmp.ge.f32.partialorder %v80, 0.5
  %vm89 = vmand %vm81, %vm85
  %vm90 = vmand %vm82, %vm86
  %vm91 = vmand %vm83, %vm87
  %vm92 = vmand %vm84, %vm88
  %vm93 = vcmp.le.f32.partialorder %v77, 14.5
  %vm94 = vcmp.le.f32.partialorder %v78, 14.5
  %vm95 = vcmp.le.f32.partialorder %v79, 14.5
  %vm96 = vcmp.le.f32.partialorder %v80, 14.5
  %vm97 = vmand %vm81, %vm93
  %vm98 = vmand %vm82, %vm94
  %vm99 = vmand %vm83, %vm95
  %vm100 = vmand %vm84, %vm96
  %vm101 = vcmp.le.f32.partialorder %v69, 14.5
  %vm102 = vcmp.le.f32.partialorder %v70, 14.5
  %vm103 = vcmp.le.f32.partialorder %v71, 14.5
  %vm104 = vcmp.le.f32.partialorder %v72, 14.5
  %vm105 = vmand %vm101, %vm85
  %vm106 = vmand %vm102, %vm86
  %vm107 = vmand %vm103, %vm87
  %vm108 = vmand %vm104, %vm88
  %vm109 = vmand %vm101, %vm93
  %vm110 = vmand %vm102, %vm94
  %vm111 = vmand %vm103, %vm95
  %vm112 = vmand %vm104, %vm96
  %117 = vrot.lane.b32.xlu0 %v31, 17
  %v118 = vpop.permute.xlu0 %117
  %119 = vrot.lane.b32.xlu0 %v27, 17
  %v120 = vpop.permute.xlu0 %119
  %121 = vrot.lane.b32.xlu0 %v28, 17
  %v122 = vpop.permute.xlu0 %121
  %123 = vrot.lane.b32.xlu0 %v30, 17
  %v124 = vpop.permute.xlu0 %123
  %vm125 = vcmask 138240
  %v126 = vsel %vm125, %v118, %v120
  %v127 = vsel %vm125, %v120, %v122
  %v128 = vsel %vm125, %v122, %v124
  %v129 = vsel %vm125, %v124, %v118
  %v134 = vsel %vm89, %v126, 0.0
  %v135 = vsel %vm90, %v127, 0.0
  %v136 = vsel %vm91, %v128, 0.0
  %v137 = vsel %vm92, %v129, 0.0
  %138 = vst [vmem:[#allocation2] sm:$0xff] %v134
  %139 = vst [vmem:[#allocation2 + $0x8] sm:$0xff] %v135
  %140 = vst [vmem:[#allocation2 + $0x10] sm:$0xff] %v136
  %141 = vst [vmem:[#allocation2 + $0x18] sm:$0xff] %v137
  %142 = vrot.lane.b32.xlu0 %v31, 16
  %v143 = vpop.permute.xlu0 %142
  %144 = vrot.lane.b32.xlu0 %v27, 16
  %v145 = vpop.permute.xlu0 %144
  %146 = vrot.lane.b32.xlu0 %v28, 16
  %v147 = vpop.permute.xlu0 %146
  %148 = vrot.lane.b32.xlu0 %v30, 16
  %v149 = vpop.permute.xlu0 %148
  %vm150 = vcmask 130048
  %v151 = vsel %vm150, %v143, %v145
  %v152 = vsel %vm150, %v145, %v147
  %v153 = vsel %vm150, %v147, %v149
  %v154 = vsel %vm150, %v149, %v143
  %v159 = vsel %vm81, %v151, 0.0
  %v160 = vsel %vm82, %v152, 0.0
  %v161 = vsel %vm83, %v153, 0.0
  %v162 = vsel %vm84, %v154, 0.0
  %163 = vst [vmem:[#allocation2 + $0x20] sm:$0xff] %v159
  %164 = vst [vmem:[#allocation2 + $0x28] sm:$0xff] %v160
  %165 = vst [vmem:[#allocation2 + $0x30] sm:$0xff] %v161
  %166 = vst [vmem:[#allocation2 + $0x38] sm:$0xff] %v162
  %167 = vrot.lane.b32.xlu0 %v31, 15
  %v168 = vpop.permute.xlu0 %167
  %169 = vrot.lane.b32.xlu0 %v27, 15
  %v170 = vpop.permute.xlu0 %169
  %171 = vrot.lane.b32.xlu0 %v28, 15
  %v172 = vpop.permute.xlu0 %171
  %173 = vrot.lane.b32.xlu0 %v30, 15
  %v174 = vpop.permute.xlu0 %173
  %vm175 = vcmask 121856
  %v176 = vsel %vm175, %v168, %v170
  %v177 = vsel %vm175, %v170, %v172
  %v178 = vsel %vm175, %v172, %v174
  %v179 = vsel %vm175, %v174, %v168
  %v184 = vsel %vm97, %v176, 0.0
  %v185 = vsel %vm98, %v177, 0.0
  %v186 = vsel %vm99, %v178, 0.0
  %v187 = vsel %vm100, %v179, 0.0
  %188 = vst [vmem:[#allocation2 + $0x40] sm:$0xff] %v184
  %189 = vst [vmem:[#allocation2 + $0x48] sm:$0xff] %v185
  %190 = vst [vmem:[#allocation2 + $0x50] sm:$0xff] %v186
  %191 = vst [vmem:[#allocation2 + $0x58] sm:$0xff] %v187
  %192 = vrot.lane.b32.xlu0 %v31, 1
  %v193 = vpop.permute.xlu0 %192
  %194 = vrot.lane.b32.xlu0 %v27, 1
  %v195 = vpop.permute.xlu0 %194
  %196 = vrot.lane.b32.xlu0 %v28, 1
  %v197 = vpop.permute.xlu0 %196
  %198 = vrot.lane.b32.xlu0 %v30, 1
  %v199 = vpop.permute.xlu0 %198
  %vm200 = vcmask 7168
  %v201 = vsel %vm200, %v193, %v195
  %v202 = vsel %vm200, %v195, %v197
  %v203 = vsel %vm200, %v197, %v199
  %v204 = vsel %vm200, %v199, %v193
  %v209 = vsel %vm85, %v201, 0.0
  %v210 = vsel %vm86, %v202, 0.0
  %v211 = vsel %vm87, %v203, 0.0
  %v212 = vsel %vm88, %v204, 0.0
  %213 = vst [vmem:[#allocation2 + $0x60] sm:$0xff] %v209
  %214 = vst [vmem:[#allocation2 + $0x68] sm:$0xff] %v210
  %215 = vst [vmem:[#allocation2 + $0x70] sm:$0xff] %v211
  %216 = vst [vmem:[#allocation2 + $0x78] sm:$0xff] %v212
  %217 = vst [vmem:[#allocation2 + $0x80] sm:$0xff] %v27
  %218 = vst [vmem:[#allocation2 + $0x88] sm:$0xff] %v28
  %219 = vst [vmem:[#allocation2 + $0x90] sm:$0xff] %v30
  %220 = vst [vmem:[#allocation2 + $0x98] sm:$0xff] %v31
  %221 = vrot.lane.b32.xlu0 %v27, 127
  %v222 = vpop.permute.xlu0 %221
  %223 = vrot.lane.b32.xlu0 %v28, 127
  %v224 = vpop.permute.xlu0 %223
  %225 = vrot.lane.b32.xlu0 %v30, 127
  %v226 = vpop.permute.xlu0 %225
  %227 = vrot.lane.b32.xlu0 %v31, 127
  %v228 = vpop.permute.xlu0 %227
  %vm229 = vcmask 1039360
  %v230 = vsel %vm229, %v222, %v224
  %v231 = vsel %vm229, %v224, %v226
  %v232 = vsel %vm229, %v226, %v228
  %v233 = vsel %vm229, %v228, %v222
  %v238 = vsel %vm93, %v230, 0.0
  %v239 = vsel %vm94, %v231, 0.0
  %v240 = vsel %vm95, %v232, 0.0
  %v241 = vsel %vm96, %v233, 0.0
  %242 = vst [vmem:[#allocation2 + $0xa0] sm:$0xff] %v238
  %243 = vst [vmem:[#allocation2 + $0xa8] sm:$0xff] %v239
  %244 = vst [vmem:[#allocation2 + $0xb0] sm:$0xff] %v240
  %245 = vst [vmem:[#allocation2 + $0xb8] sm:$0xff] %v241
  %246 = vrot.lane.b32.xlu0 %v27, 113
  %v247 = vpop.permute.xlu0 %246
  %248 = vrot.lane.b32.xlu0 %v28, 113
  %v249 = vpop.permute.xlu0 %248
  %250 = vrot.lane.b32.xlu0 %v30, 113
  %v251 = vpop.permute.xlu0 %250
  %252 = vrot.lane.b32.xlu0 %v31, 113
  %v253 = vpop.permute.xlu0 %252
  %vm254 = vcmask 924672
  %v255 = vsel %vm254, %v247, %v249
  %v256 = vsel %vm254, %v249, %v251
  %v257 = vsel %vm254, %v251, %v253
  %v258 = vsel %vm254, %v253, %v247
  %v263 = vsel %vm105, %v255, 0.0
  %v264 = vsel %vm106, %v256, 0.0
  %v265 = vsel %vm107, %v257, 0.0
  %v266 = vsel %vm108, %v258, 0.0
  %267 = vst [vmem:[#allocation2 + $0xc0] sm:$0xff] %v263
  %268 = vst [vmem:[#allocation2 + $0xc8] sm:$0xff] %v264
  %269 = vst [vmem:[#allocation2 + $0xd0] sm:$0xff] %v265
  %270 = vst [vmem:[#allocation2 + $0xd8] sm:$0xff] %v266
  %271 = vrot.lane.b32.xlu0 %v27, 112
  %v272 = vpop.permute.xlu0 %271
  %273 = vrot.lane.b32.xlu0 %v28, 112
  %v274 = vpop.permute.xlu0 %273
  %275 = vrot.lane.b32.xlu0 %v30, 112
  %v276 = vpop.permute.xlu0 %275
  %277 = vrot.lane.b32.xlu0 %v31, 112
  %v278 = vpop.permute.xlu0 %277
  %vm279 = vcmask 916480
  %v280 = vsel %vm279, %v272, %v274
  %v281 = vsel %vm279, %v274, %v276
  %v282 = vsel %vm279, %v276, %v278
  %v283 = vsel %vm279, %v278, %v272
  %v288 = vsel %vm101, %v280, 0.0
  %v289 = vsel %vm102, %v281, 0.0
  %v290 = vsel %vm103, %v282, 0.0
  %v291 = vsel %vm104, %v283, 0.0
  %292 = vst [vmem:[#allocation2 + $0xe0] sm:$0xff] %v288
  %293 = vst [vmem:[#allocation2 + $0xe8] sm:$0xff] %v289
  %294 = vst [vmem:[#allocation2 + $0xf0] sm:$0xff] %v290
  %295 = vst [vmem:[#allocation2 + $0xf8] sm:$0xff] %v291
  %296 = vrot.lane.b32.xlu0 %v27, 111
  %v297 = vpop.permute.xlu0 %296
  %298 = vrot.lane.b32.xlu0 %v28, 111
  %v299 = vpop.permute.xlu0 %298
  %300 = vrot.lane.b32.xlu0 %v30, 111
  %v301 = vpop.permute.xlu0 %300
  %302 = vrot.lane.b32.xlu0 %v31, 111
  %v303 = vpop.permute.xlu0 %302
  %vm304 = vcmask 908288
  %v305 = vsel %vm304, %v297, %v299
  %v306 = vsel %vm304, %v299, %v301
  %v307 = vsel %vm304, %v301, %v303
  %v308 = vsel %vm304, %v303, %v297
  %v313 = vsel %vm109, %v305, 0.0
  %v314 = vsel %vm110, %v306, 0.0
  %v315 = vsel %vm111, %v307, 0.0
  %v316 = vsel %vm112, %v308, 0.0
  %317 = vst [vmem:[#allocation2 + $0x100] sm:$0xff] %v313
  %318 = vst [vmem:[#allocation2 + $0x108] sm:$0xff] %v314
  %319 = vst [vmem:[#allocation2 + $0x110] sm:$0xff] %v315
  %320 = vst [vmem:[#allocation2 + $0x118] sm:$0xff] %v316
  %v321 = vld [vmem:[%s1] sm:$0xf]
  %v322 = vld [vmem:[#allocation2] sm:$0xff]
  %v323 = vld [vmem:[#allocation2 + $0x8] sm:$0xff]
  %v324 = vld [vmem:[#allocation2 + $0x10] sm:$0xff]
  %v325 = vld [vmem:[#allocation2 + $0x18] sm:$0xff]
  %v326 = vld [vmem:[#allocation2 + $0x20] sm:$0xff]
  %v327 = vld [vmem:[#allocation2 + $0x28] sm:$0xff]
  %v328 = vld [vmem:[#allocation2 + $0x30] sm:$0xff]
  %v329 = vld [vmem:[#allocation2 + $0x38] sm:$0xff]
  %v330 = vld [vmem:[#allocation2 + $0x40] sm:$0xff]
  %v331 = vld [vmem:[#allocation2 + $0x48] sm:$0xff]
  %v332 = vld [vmem:[#allocation2 + $0x50] sm:$0xff]
  %v333 = vld [vmem:[#allocation2 + $0x58] sm:$0xff]
  %v334 = vld [vmem:[#allocation2 + $0x60] sm:$0xff]
  %v335 = vld [vmem:[#allocation2 + $0x68] sm:$0xff]
  %v336 = vld [vmem:[#allocation2 + $0x70] sm:$0xff]
  %v337 = vld [vmem:[#allocation2 + $0x78] sm:$0xff]
  %v338 = vld [vmem:[#allocation2 + $0x80] sm:$0xff]
  %v339 = vld [vmem:[#allocation2 + $0x88] sm:$0xff]
  %v340 = vld [vmem:[#allocation2 + $0x90] sm:$0xff]
  %v341 = vld [vmem:[#allocation2 + $0x98] sm:$0xff]
  %v342 = vld [vmem:[#allocation2 + $0xa0] sm:$0xff]
  %v343 = vld [vmem:[#allocation2 + $0xa8] sm:$0xff]
  %v344 = vld [vmem:[#allocation2 + $0xb0] sm:$0xff]
  %v345 = vld [vmem:[#allocation2 + $0xb8] sm:$0xff]
  %v346 = vld [vmem:[#allocation2 + $0xc0] sm:$0xff]
  %v347 = vld [vmem:[#allocation2 + $0xc8] sm:$0xff]
  %v348 = vld [vmem:[#allocation2 + $0xd0] sm:$0xff]
  %v349 = vld [vmem:[#allocation2 + $0xd8] sm:$0xff]
  %v350 = vld [vmem:[#allocation2 + $0xe0] sm:$0xff]
  %v351 = vld [vmem:[#allocation2 + $0xe8] sm:$0xff]
  %v352 = vld [vmem:[#allocation2 + $0xf0] sm:$0xff]
  %v353 = vld [vmem:[#allocation2 + $0xf8] sm:$0xff]
  %v354 = vld [vmem:[#allocation2 + $0x100] sm:$0xff]
  %v355 = vld [vmem:[#allocation2 + $0x108] sm:$0xff]
  %v356 = vld [vmem:[#allocation2 + $0x110] sm:$0xff]
  %v357 = vld [vmem:[#allocation2 + $0x118] sm:$0xff]
  %v358 = vpack.c.bf16 %v326, %v322
  %v359 = vpack.c.bf16 %v327, %v323
  %v360 = vpack.c.bf16 %v328, %v324
  %v361 = vpack.c.bf16 %v329, %v325
  %v362 = vpack.c.bf16 %v334, %v330
  %v363 = vpack.c.bf16 %v335, %v331
  %v364 = vpack.c.bf16 %v336, %v332
  %v365 = vpack.c.bf16 %v337, %v333
  %v366 = vpack.c.bf16 %v342, %v338
  %v367 = vpack.c.bf16 %v343, %v339
  %v368 = vpack.c.bf16 %v344, %v340
  %v369 = vpack.c.bf16 %v345, %v341
  %v370 = vpack.c.bf16 %v350, %v346
  %v371 = vpack.c.bf16 %v351, %v347
  %v372 = vpack.c.bf16 %v352, %v348
  %v373 = vpack.c.bf16 %v353, %v349
  %v374 = vpack.c.bf16 %v354, %v354
  %v375 = vpack.c.bf16 %v355, %v355
  %v376 = vpack.c.bf16 %v356, %v356
  %v377 = vpack.c.bf16 %v357, %v357
  %vm378 = vcmask 588800
  %v380 = vsel %vm378, %v321, 0
  %vm382 = vcmask 1043456
  %v384 = vsel %vm382, %v374, 0
  %v387 = vsel %vm382, %v375, 0
  %v390 = vsel %vm382, %v376, 0
  %v393 = vsel %vm382, %v377, 0
  %395 = vmatpush.bf16.msra.mxu0 0
  %396 = vmatpush.bf16.msra.mxu0 0
  %397 = vmatpush.bf16.msra.mxu0 0
  %398 = vmatpush.bf16.msra.mxu0 %v384
  %399 = vmatpush.bf16.msra.mxu0 %v370
  %400 = vmatpush.bf16.msra.mxu0 %v366
  %401 = vmatpush.bf16.msra.mxu0 %v362
  %402 = vmatpush.bf16.msra.mxu0 %v358
  %403 = vmatmul.bf16.gmra.mxu0 %v380
  %v404 = vpop.f32.mrf.mxu0
  %v405 = vadd.f32 0.0, %v404
  %v406 = vpop.f32.mrf.mxu0
  %407 = vdwg.mxu0
  %408 = vmatpush.bf16.msra.mxu0 0
  %409 = vmatpush.bf16.msra.mxu0 0
  %410 = vmatpush.bf16.msra.mxu0 0
  %411 = vmatpush.bf16.msra.mxu0 %v387
  %412 = vmatpush.bf16.msra.mxu0 %v371
  %413 = vmatpush.bf16.msra.mxu0 %v367
  %414 = vmatpush.bf16.msra.mxu0 %v363
  %415 = vmatpush.bf16.msra.mxu0 %v359
  %416 = vmatmul.bf16.gmra.mxu0 %v380
  %v417 = vpop.f32.mrf.mxu0
  %v418 = vadd.f32 0.0, %v417
  %v419 = vpop.f32.mrf.mxu0
  %420 = vdwg.mxu0
  %421 = vmatpush.bf16.msra.mxu0 0
  %422 = vmatpush.bf16.msra.mxu0 0
  %423 = vmatpush.bf16.msra.mxu0 0
  %424 = vmatpush.bf16.msra.mxu0 %v390
  %425 = vmatpush.bf16.msra.mxu0 %v372
  %426 = vmatpush.bf16.msra.mxu0 %v368
  %427 = vmatpush.bf16.msra.mxu0 %v364
  %428 = vmatpush.bf16.msra.mxu0 %v360
  %429 = vmatmul.bf16.gmra.mxu0 %v380
  %v430 = vpop.f32.mrf.mxu0
  %v431 = vadd.f32 0.0, %v430
  %v432 = vpop.f32.mrf.mxu0
  %433 = vdwg.mxu0
  %434 = vmatpush.bf16.msra.mxu0 0
  %435 = vmatpush.bf16.msra.mxu0 0
  %436 = vmatpush.bf16.msra.mxu0 0
  %437 = vmatpush.bf16.msra.mxu0 %v393
  %438 = vmatpush.bf16.msra.mxu0 %v373
  %439 = vmatpush.bf16.msra.mxu0 %v369
  %440 = vmatpush.bf16.msra.mxu0 %v365
  %441 = vmatpush.bf16.msra.mxu0 %v361
  %442 = vmatmul.bf16.gmra.mxu0 %v380
  %v443 = vpop.f32.mrf.mxu0
  %v444 = vadd.f32 0.0, %v443
  %v445 = vpop.f32.mrf.mxu0
  %446 = vdwg.mxu0
  %v447 = vadd.f32 %v405, %v418
  %v448 = vadd.f32 %v447, %v431
  %v449 = vadd.f32 %v448, %v444
  %450 = vadd.xlane.f32.xlu0 %v449
  %v451 = vpop.xlane.xlu0 %450
  %v452 = vmul.f32 %v451, 0.001953125
  %v453 = vmul.f32 %v405, %v405
  %v454 = vmul.f32 %v418, %v418
  %v455 = vmul.f32 %v431, %v431
  %v456 = vmul.f32 %v444, %v444
  %v457 = vadd.f32 %v453, %v454
  %v458 = vadd.f32 %v457, %v455
  %v459 = vadd.f32 %v458, %v456
  %460 = vadd.xlane.f32.xlu0 %v459
  %v461 = vpop.xlane.xlu0 %460
  %v462 = vmul.f32 %v461, 0.001953125
  %v463 = vmul.f32 %v452, %v452
  %v464 = vsub.f32 %v462, %v463
  %v465 = vadd.f32 %v464, 1e-05
  %v466 = vrsqrt.pop %v465
  %v467 = vmul.f32 %v466, %v465
  %v468 = vmul.f32 %v467, %v466
  %v469 = vmul.f32 0.5, %v468
  %v470 = vsub.f32 1.5, %v469
  %v471 = vmul.f32 %v466, %v470
  %vm472 = vweird.f32 %v465
  %vm473 = vweird.f32 %v466
  %vm474 = vmor %vm472, %vm473
  %v475 = vsel %vm474, %v466, %v471
  %v476 = vld [vmem:[%s2] sm:$0xff]
  %v477 = vmul.f32 %v475, %v476
  %v478 = vld [vmem:[%s3] sm:$0xff]
  %v479 = vmul.f32 %v452, %v477
  %v480 = vsub.f32 %v478, %v479
  %482 = vset.pattern.permute.xlu0 0
  %483 = vperm.xlu0 %482, %v477
  %v484 = vpop.permute.xlu0 %483
  %v486 = vmul.f32 %v405, %v484
  %v487 = vmul.f32 %v418, %v484
  %v488 = vmul.f32 %v431, %v484
  %v489 = vmul.f32 %v444, %v484
  %491 = vset.pattern.permute.xlu0 0
  %492 = vperm.xlu0 %491, %v480
  %v493 = vpop.permute.xlu0 %492
  %v495 = vadd.f32 %v486, %v493
  %v496 = vadd.f32 %v487, %v493
  %v497 = vadd.f32 %v488, %v493
  %v498 = vadd.f32 %v489, %v493
  %v499 = vmax.f32 %v495, 0.0
  %v500 = vmax.f32 %v496, 0.0
  %v501 = vmax.f32 %v497, 0.0
  %v502 = vmax.f32 %v498, 0.0
  %507 = vrot.lane.b32.xlu0 %v502, 17
  %v508 = vpop.permute.xlu0 %507
  %509 = vrot.lane.b32.xlu0 %v499, 17
  %v510 = vpop.permute.xlu0 %509
  %511 = vrot.lane.b32.xlu0 %v500, 17
  %v512 = vpop.permute.xlu0 %511
  %513 = vrot.lane.b32.xlu0 %v501, 17
  %v514 = vpop.permute.xlu0 %513
  %v515 = vsel %vm125, %v508, %v510
  %v516 = vsel %vm125, %v510, %v512
  %v517 = vsel %vm125, %v512, %v514
  %v518 = vsel %vm125, %v514, %v508
  %v523 = vsel %vm89, %v515, 0.0
  %v524 = vsel %vm90, %v516, 0.0
  %v525 = vsel %vm91, %v517, 0.0
  %v526 = vsel %vm92, %v518, 0.0
  %527 = vst [vmem:[#allocation2] sm:$0xff] %v523
  %528 = vst [vmem:[#allocation2 + $0x8] sm:$0xff] %v524
  %529 = vst [vmem:[#allocation2 + $0x10] sm:$0xff] %v525
  %530 = vst [vmem:[#allocation2 + $0x18] sm:$0xff] %v526
  %531 = vrot.lane.b32.xlu0 %v502, 16
  %v532 = vpop.permute.xlu0 %531
  %533 = vrot.lane.b32.xlu0 %v499, 16
  %v534 = vpop.permute.xlu0 %533
  %535 = vrot.lane.b32.xlu0 %v500, 16
  %v536 = vpop.permute.xlu0 %535
  %537 = vrot.lane.b32.xlu0 %v501, 16
  %v538 = vpop.permute.xlu0 %537
  %v539 = vsel %vm150, %v532, %v534
  %v540 = vsel %vm150, %v534, %v536
  %v541 = vsel %vm150, %v536, %v538
  %v542 = vsel %vm150, %v538, %v532
  %v547 = vsel %vm81, %v539, 0.0
  %v548 = vsel %vm82, %v540, 0.0
  %v549 = vsel %vm83, %v541, 0.0
  %v550 = vsel %vm84, %v542, 0.0
  %551 = vst [vmem:[#allocation2 + $0x20] sm:$0xff] %v547
  %552 = vst [vmem:[#allocation2 + $0x28] sm:$0xff] %v548
  %553 = vst [vmem:[#allocation2 + $0x30] sm:$0xff] %v549
  %554 = vst [vmem:[#allocation2 + $0x38] sm:$0xff] %v550
  %555 = vrot.lane.b32.xlu0 %v502, 15
  %v556 = vpop.permute.xlu0 %555
  %557 = vrot.lane.b32.xlu0 %v499, 15
  %v558 = vpop.permute.xlu0 %557
  %559 = vrot.lane.b32.xlu0 %v500, 15
  %v560 = vpop.permute.xlu0 %559
  %561 = vrot.lane.b32.xlu0 %v501, 15
  %v562 = vpop.permute.xlu0 %561
  %v563 = vsel %vm175, %v556, %v558
  %v564 = vsel %vm175, %v558, %v560
  %v565 = vsel %vm175, %v560, %v562
  %v566 = vsel %vm175, %v562, %v556
  %v571 = vsel %vm97, %v563, 0.0
  %v572 = vsel %vm98, %v564, 0.0
  %v573 = vsel %vm99, %v565, 0.0
  %v574 = vsel %vm100, %v566, 0.0
  %575 = vst [vmem:[#allocation2 + $0x40] sm:$0xff] %v571
  %576 = vst [vmem:[#allocation2 + $0x48] sm:$0xff] %v572
  %577 = vst [vmem:[#allocation2 + $0x50] sm:$0xff] %v573
  %578 = vst [vmem:[#allocation2 + $0x58] sm:$0xff] %v574
  %579 = vrot.lane.b32.xlu0 %v502, 1
  %v580 = vpop.permute.xlu0 %579
  %581 = vrot.lane.b32.xlu0 %v499, 1
  %v582 = vpop.permute.xlu0 %581
  %583 = vrot.lane.b32.xlu0 %v500, 1
  %v584 = vpop.permute.xlu0 %583
  %585 = vrot.lane.b32.xlu0 %v501, 1
  %v586 = vpop.permute.xlu0 %585
  %v587 = vsel %vm200, %v580, %v582
  %v588 = vsel %vm200, %v582, %v584
  %v589 = vsel %vm200, %v584, %v586
  %v590 = vsel %vm200, %v586, %v580
  %v595 = vsel %vm85, %v587, 0.0
  %v596 = vsel %vm86, %v588, 0.0
  %v597 = vsel %vm87, %v589, 0.0
  %v598 = vsel %vm88, %v590, 0.0
  %599 = vst [vmem:[#allocation2 + $0x60] sm:$0xff] %v595
  %600 = vst [vmem:[#allocation2 + $0x68] sm:$0xff] %v596
  %601 = vst [vmem:[#allocation2 + $0x70] sm:$0xff] %v597
  %602 = vst [vmem:[#allocation2 + $0x78] sm:$0xff] %v598
  %603 = vst [vmem:[#allocation2 + $0x80] sm:$0xff] %v499
  %604 = vst [vmem:[#allocation2 + $0x88] sm:$0xff] %v500
  %605 = vst [vmem:[#allocation2 + $0x90] sm:$0xff] %v501
  %606 = vst [vmem:[#allocation2 + $0x98] sm:$0xff] %v502
  %607 = vrot.lane.b32.xlu0 %v499, 127
  %v608 = vpop.permute.xlu0 %607
  %609 = vrot.lane.b32.xlu0 %v500, 127
  %v610 = vpop.permute.xlu0 %609
  %611 = vrot.lane.b32.xlu0 %v501, 127
  %v612 = vpop.permute.xlu0 %611
  %613 = vrot.lane.b32.xlu0 %v502, 127
  %v614 = vpop.permute.xlu0 %613
  %v615 = vsel %vm229, %v608, %v610
  %v616 = vsel %vm229, %v610, %v612
  %v617 = vsel %vm229, %v612, %v614
  %v618 = vsel %vm229, %v614, %v608
  %v623 = vsel %vm93, %v615, 0.0
  %v624 = vsel %vm94, %v616, 0.0
  %v625 = vsel %vm95, %v617, 0.0
  %v626 = vsel %vm96, %v618, 0.0
  %627 = vst [vmem:[#allocation2 + $0xa0] sm:$0xff] %v623
  %628 = vst [vmem:[#allocation2 + $0xa8] sm:$0xff] %v624
  %629 = vst [vmem:[#allocation2 + $0xb0] sm:$0xff] %v625
  %630 = vst [vmem:[#allocation2 + $0xb8] sm:$0xff] %v626
  %631 = vrot.lane.b32.xlu0 %v499, 113
  %v632 = vpop.permute.xlu0 %631
  %633 = vrot.lane.b32.xlu0 %v500, 113
  %v634 = vpop.permute.xlu0 %633
  %635 = vrot.lane.b32.xlu0 %v501, 113
  %v636 = vpop.permute.xlu0 %635
  %637 = vrot.lane.b32.xlu0 %v502, 113
  %v638 = vpop.permute.xlu0 %637
  %v639 = vsel %vm254, %v632, %v634
  %v640 = vsel %vm254, %v634, %v636
  %v641 = vsel %vm254, %v636, %v638
  %v642 = vsel %vm254, %v638, %v632
  %v647 = vsel %vm105, %v639, 0.0
  %v648 = vsel %vm106, %v640, 0.0
  %v649 = vsel %vm107, %v641, 0.0
  %v650 = vsel %vm108, %v642, 0.0
  %651 = vst [vmem:[#allocation2 + $0xc0] sm:$0xff] %v647
  %652 = vst [vmem:[#allocation2 + $0xc8] sm:$0xff] %v648
  %653 = vst [vmem:[#allocation2 + $0xd0] sm:$0xff] %v649
  %654 = vst [vmem:[#allocation2 + $0xd8] sm:$0xff] %v650
  %655 = vrot.lane.b32.xlu0 %v499, 112
  %v656 = vpop.permute.xlu0 %655
  %657 = vrot.lane.b32.xlu0 %v500, 112
  %v658 = vpop.permute.xlu0 %657
  %659 = vrot.lane.b32.xlu0 %v501, 112
  %v660 = vpop.permute.xlu0 %659
  %661 = vrot.lane.b32.xlu0 %v502, 112
  %v662 = vpop.permute.xlu0 %661
  %v663 = vsel %vm279, %v656, %v658
  %v664 = vsel %vm279, %v658, %v660
  %v665 = vsel %vm279, %v660, %v662
  %v666 = vsel %vm279, %v662, %v656
  %v671 = vsel %vm101, %v663, 0.0
  %v672 = vsel %vm102, %v664, 0.0
  %v673 = vsel %vm103, %v665, 0.0
  %v674 = vsel %vm104, %v666, 0.0
  %675 = vst [vmem:[#allocation2 + $0xe0] sm:$0xff] %v671
  %676 = vst [vmem:[#allocation2 + $0xe8] sm:$0xff] %v672
  %677 = vst [vmem:[#allocation2 + $0xf0] sm:$0xff] %v673
  %678 = vst [vmem:[#allocation2 + $0xf8] sm:$0xff] %v674
  %679 = vrot.lane.b32.xlu0 %v499, 111
  %v680 = vpop.permute.xlu0 %679
  %681 = vrot.lane.b32.xlu0 %v500, 111
  %v682 = vpop.permute.xlu0 %681
  %683 = vrot.lane.b32.xlu0 %v501, 111
  %v684 = vpop.permute.xlu0 %683
  %685 = vrot.lane.b32.xlu0 %v502, 111
  %v686 = vpop.permute.xlu0 %685
  %v687 = vsel %vm304, %v680, %v682
  %v688 = vsel %vm304, %v682, %v684
  %v689 = vsel %vm304, %v684, %v686
  %v690 = vsel %vm304, %v686, %v680
  %v695 = vsel %vm109, %v687, 0.0
  %v696 = vsel %vm110, %v688, 0.0
  %v697 = vsel %vm111, %v689, 0.0
  %v698 = vsel %vm112, %v690, 0.0
  %699 = vst [vmem:[#allocation2 + $0x100] sm:$0xff] %v695
  %700 = vst [vmem:[#allocation2 + $0x108] sm:$0xff] %v696
  %701 = vst [vmem:[#allocation2 + $0x110] sm:$0xff] %v697
  %702 = vst [vmem:[#allocation2 + $0x118] sm:$0xff] %v698
  %v703 = vld [vmem:[%s4] sm:$0xf]
  %v704 = vld [vmem:[#allocation2] sm:$0xff]
  %v705 = vld [vmem:[#allocation2 + $0x8] sm:$0xff]
  %v706 = vld [vmem:[#allocation2 + $0x10] sm:$0xff]
  %v707 = vld [vmem:[#allocation2 + $0x18] sm:$0xff]
  %v708 = vld [vmem:[#allocation2 + $0x20] sm:$0xff]
  %v709 = vld [vmem:[#allocation2 + $0x28] sm:$0xff]
  %v710 = vld [vmem:[#allocation2 + $0x30] sm:$0xff]
  %v711 = vld [vmem:[#allocation2 + $0x38] sm:$0xff]
  %v712 = vld [vmem:[#allocation2 + $0x40] sm:$0xff]
  %v713 = vld [vmem:[#allocation2 + $0x48] sm:$0xff]
  %v714 = vld [vmem:[#allocation2 + $0x50] sm:$0xff]
  %v715 = vld [vmem:[#allocation2 + $0x58] sm:$0xff]
  %v716 = vld [vmem:[#allocation2 + $0x60] sm:$0xff]
  %v717 = vld [vmem:[#allocation2 + $0x68] sm:$0xff]
  %v718 = vld [vmem:[#allocation2 + $0x70] sm:$0xff]
  %v719 = vld [vmem:[#allocation2 + $0x78] sm:$0xff]
  %v720 = vld [vmem:[#allocation2 + $0x80] sm:$0xff]
  %v721 = vld [vmem:[#allocation2 + $0x88] sm:$0xff]
  %v722 = vld [vmem:[#allocation2 + $0x90] sm:$0xff]
  %v723 = vld [vmem:[#allocation2 + $0x98] sm:$0xff]
  %v724 = vld [vmem:[#allocation2 + $0xa0] sm:$0xff]
  %v725 = vld [vmem:[#allocation2 + $0xa8] sm:$0xff]
  %v726 = vld [vmem:[#allocation2 + $0xb0] sm:$0xff]
  %v727 = vld [vmem:[#allocation2 + $0xb8] sm:$0xff]
  %v728 = vld [vmem:[#allocation2 + $0xc0] sm:$0xff]
  %v729 = vld [vmem:[#allocation2 + $0xc8] sm:$0xff]
  %v730 = vld [vmem:[#allocation2 + $0xd0] sm:$0xff]
  %v731 = vld [vmem:[#allocation2 + $0xd8] sm:$0xff]
  %v732 = vld [vmem:[#allocation2 + $0xe0] sm:$0xff]
  %v733 = vld [vmem:[#allocation2 + $0xe8] sm:$0xff]
  %v734 = vld [vmem:[#allocation2 + $0xf0] sm:$0xff]
  %v735 = vld [vmem:[#allocation2 + $0xf8] sm:$0xff]
  %v736 = vld [vmem:[#allocation2 + $0x100] sm:$0xff]
  %v737 = vld [vmem:[#allocation2 + $0x108] sm:$0xff]
  %v738 = vld [vmem:[#allocation2 + $0x110] sm:$0xff]
  %v739 = vld [vmem:[#allocation2 + $0x118] sm:$0xff]
  %v740 = vpack.c.bf16 %v708, %v704
  %v741 = vpack.c.bf16 %v709, %v705
  %v742 = vpack.c.bf16 %v710, %v706
  %v743 = vpack.c.bf16 %v711, %v707
  %v744 = vpack.c.bf16 %v716, %v712
  %v745 = vpack.c.bf16 %v717, %v713
  %v746 = vpack.c.bf16 %v718, %v714
  %v747 = vpack.c.bf16 %v719, %v715
  %v748 = vpack.c.bf16 %v724, %v720
  %v749 = vpack.c.bf16 %v725, %v721
  %v750 = vpack.c.bf16 %v726, %v722
  %v751 = vpack.c.bf16 %v727, %v723
  %v752 = vpack.c.bf16 %v732, %v728
  %v753 = vpack.c.bf16 %v733, %v729
  %v754 = vpack.c.bf16 %v734, %v730
  %v755 = vpack.c.bf16 %v735, %v731
  %v756 = vpack.c.bf16 %v736, %v736
  %v757 = vpack.c.bf16 %v737, %v737
  %v758 = vpack.c.bf16 %v738, %v738
  %v759 = vpack.c.bf16 %v739, %v739
  %v761 = vsel %vm378, %v703, 0
  %v764 = vsel %vm382, %v756, 0
  %v767 = vsel %vm382, %v757, 0
  %v770 = vsel %vm382, %v758, 0
  %v773 = vsel %vm382, %v759, 0
  %775 = vmatpush.bf16.msra.mxu0 0
  %776 = vmatpush.bf16.msra.mxu0 0
  %777 = vmatpush.bf16.msra.mxu0 0
  %778 = vmatpush.bf16.msra.mxu0 %v764
  %779 = vmatpush.bf16.msra.mxu0 %v752
  %780 = vmatpush.bf16.msra.mxu0 %v748
  %781 = vmatpush.bf16.msra.mxu0 %v744
  %782 = vmatpush.bf16.msra.mxu0 %v740
  %783 = vmatmul.bf16.gmra.mxu0 %v761
  %v784 = vpop.f32.mrf.mxu0
  %v785 = vadd.f32 0.0, %v784
  %v786 = vpop.f32.mrf.mxu0
  %787 = vdwg.mxu0
  %788 = vmatpush.bf16.msra.mxu0 0
  %789 = vmatpush.bf16.msra.mxu0 0
  %790 = vmatpush.bf16.msra.mxu0 0
  %791 = vmatpush.bf16.msra.mxu0 %v767
  %792 = vmatpush.bf16.msra.mxu0 %v753
  %793 = vmatpush.bf16.msra.mxu0 %v749
  %794 = vmatpush.bf16.msra.mxu0 %v745
  %795 = vmatpush.bf16.msra.mxu0 %v741
  %796 = vmatmul.bf16.gmra.mxu0 %v761
  %v797 = vpop.f32.mrf.mxu0
  %v798 = vadd.f32 0.0, %v797
  %v799 = vpop.f32.mrf.mxu0
  %800 = vdwg.mxu0
  %801 = vmatpush.bf16.msra.mxu0 0
  %802 = vmatpush.bf16.msra.mxu0 0
  %803 = vmatpush.bf16.msra.mxu0 0
  %804 = vmatpush.bf16.msra.mxu0 %v770
  %805 = vmatpush.bf16.msra.mxu0 %v754
  %806 = vmatpush.bf16.msra.mxu0 %v750
  %807 = vmatpush.bf16.msra.mxu0 %v746
  %808 = vmatpush.bf16.msra.mxu0 %v742
  %809 = vmatmul.bf16.gmra.mxu0 %v761
  %v810 = vpop.f32.mrf.mxu0
  %v811 = vadd.f32 0.0, %v810
  %v812 = vpop.f32.mrf.mxu0
  %813 = vdwg.mxu0
  %814 = vmatpush.bf16.msra.mxu0 0
  %815 = vmatpush.bf16.msra.mxu0 0
  %816 = vmatpush.bf16.msra.mxu0 0
  %817 = vmatpush.bf16.msra.mxu0 %v773
  %818 = vmatpush.bf16.msra.mxu0 %v755
  %819 = vmatpush.bf16.msra.mxu0 %v751
  %820 = vmatpush.bf16.msra.mxu0 %v747
  %821 = vmatpush.bf16.msra.mxu0 %v743
  %822 = vmatmul.bf16.gmra.mxu0 %v761
  %v823 = vpop.f32.mrf.mxu0
  %v824 = vadd.f32 0.0, %v823
  %v825 = vpop.f32.mrf.mxu0
  %826 = vdwg.mxu0
  %v827 = vadd.f32 %v785, %v798
  %v828 = vadd.f32 %v827, %v811
  %v829 = vadd.f32 %v828, %v824
  %830 = vadd.xlane.f32.xlu0 %v829
  %v831 = vpop.xlane.xlu0 %830
  %v832 = vmul.f32 %v831, 0.001953125
  %v833 = vmul.f32 %v785, %v785
  %v834 = vmul.f32 %v798, %v798
  %v835 = vmul.f32 %v811, %v811
  %v836 = vmul.f32 %v824, %v824
  %v837 = vadd.f32 %v833, %v834
  %v838 = vadd.f32 %v837, %v835
  %v839 = vadd.f32 %v838, %v836
  %840 = vadd.xlane.f32.xlu0 %v839
  %v841 = vpop.xlane.xlu0 %840
  %v842 = vmul.f32 %v841, 0.001953125
  %v843 = vmul.f32 %v832, %v832
  %v844 = vsub.f32 %v842, %v843
  %v845 = vadd.f32 %v844, 1e-05
  %v846 = vrsqrt.pop %v845
  %v847 = vmul.f32 %v846, %v845
  %v848 = vmul.f32 %v847, %v846
  %v849 = vmul.f32 0.5, %v848
  %v850 = vsub.f32 1.5, %v849
  %v851 = vmul.f32 %v846, %v850
  %vm852 = vweird.f32 %v845
  %vm853 = vweird.f32 %v846
  %vm854 = vmor %vm852, %vm853
  %v855 = vsel %vm854, %v846, %v851
  %v856 = vld [vmem:[%s5] sm:$0xff]
  %v857 = vmul.f32 %v855, %v856
  %v858 = vld [vmem:[%s6] sm:$0xff]
  %v859 = vmul.f32 %v832, %v857
  %v860 = vsub.f32 %v858, %v859
  %862 = vset.pattern.permute.xlu0 0
  %863 = vperm.xlu0 %862, %v857
  %v864 = vpop.permute.xlu0 %863
  %v866 = vmul.f32 %v785, %v864
  %v867 = vmul.f32 %v798, %v864
  %v868 = vmul.f32 %v811, %v864
  %v869 = vmul.f32 %v824, %v864
  %871 = vset.pattern.permute.xlu0 0
  %872 = vperm.xlu0 %871, %v860
  %v873 = vpop.permute.xlu0 %872
  %v875 = vadd.f32 %v866, %v873
  %v876 = vadd.f32 %v867, %v873
  %v877 = vadd.f32 %v868, %v873
  %v878 = vadd.f32 %v869, %v873
  %v879 = vadd.f32 %v875, %v27
  %v880 = vadd.f32 %v876, %v28
  %v881 = vadd.f32 %v877, %v30
  %v882 = vadd.f32 %v878, %v31
  %v883 = vmax.f32 %v879, 0.0
  %v884 = vmax.f32 %v880, 0.0
  %v885 = vmax.f32 %v881, 0.0
  %v886 = vmax.f32 %v882, 0.0
  %887 = vst [vmem:[%s7] sm:$0xff] %v883
  %888 = vst [vmem:[%s7 + $0x8] sm:$0xff] %v884
  %s889 = scalar_lea.vmem %s7, 16
  %890 = vst [vmem:[%s889] sm:$0xff] %v885
  %891 = vst [vmem:[%s889 + $0x8] sm:$0xff] %v886
  // Predicated region
  $region30: #{basic_block_forward.1} parent=0 // pred_check
    _
  $region31: #{basic_block_forward.1} parent=0 // pred_check_branch
    %893 = sbr.rel (0) target = $region33
  $region32: #{basic_block_forward.1} parent=0 // pred_region
    _
  $region33: #{basic_block_forward.1} parent=0 // pred_fallthru
    _
  // Predicated region
  $region34: #{basic_block_forward.1} parent=0 // pred_check
    _
  $region35: #{basic_block_forward.1} parent=0 // pred_check_branch
    %895 = sbr.rel (0) target = $region37
  $region36: #{basic_block_forward.1} parent=0 // pred_region
    _
  $region37: #{basic_block_forward.1} parent=0 // pred_fallthru
    _

</llo_original>
